<compile_context>
chip_gen: v6e
topology: v6e:2x2x1
jax: 0.10.0
libtpu: 0.0.40
codegen_flags: <defaults>
</compile_context>

<pallas_src>
import jax
import jax.numpy as jnp
from jax.experimental import pallas as pl
from jax.experimental.pallas import tpu as pltpu


def _round_up(n, m):
    return ((n + m - 1) // m) * m


def _linear11_kernel(x_ref, w_ref, b_ref, o_ref):
    # y = x * w + b on one lane-dense (block_rows, lane_width) tile.
    # Read native dtype, compute in f32 on the VPU, cast on store.
    w = w_ref[0, 0]
    b = b_ref[0, 0]
    x = x_ref[...].astype(jnp.float32)
    o_ref[...] = (x * w + b).astype(o_ref.dtype)


def linear_pallas(x, weight, bias, *,
                  lane_width=512, max_block_rows=512,
                  small_batch_threshold=1024):
    """Equivalent of torch.nn.Linear(1, 1): y = x @ weight.T + bias.

    x:      (B, 1)
    weight: (1, 1) (PyTorch layout: (out_features, in_features))
    bias:   (1,)
    """
    B, in_f = x.shape
    out_f, in_f_w = weight.shape
    assert in_f == 1 and out_f == 1 and in_f_w == 1, "specialized to Linear(1, 1)"

    w_s = weight.reshape(1, 1).astype(jnp.float32)   # SMEM scalar
    b_s = bias.reshape(1, 1).astype(jnp.float32)     # SMEM scalar

    # Tiny batches: pallas_call fixed overhead (~1 us) dwarfs a single FMA,
    # so a fused XLA elementwise op is strictly cheaper than any kernel.
    if B <= small_batch_threshold:
        return (x.astype(jnp.float32) * w_s[0, 0] + b_s[0, 0]).astype(jnp.float32)

    # ---- Lane-dense repacking --------------------------------------------
    # A (B, 1) f32 array occupies 1 of 128 lanes per vreg; repack the batch
    # into a (rows, lane_width) slab so every vreg/DMA/store is full-width.
    rows = -(-B // lane_width)                             # cdiv(B, lane_width)
    block_rows = min(max_block_rows, _round_up(rows, 8))   # (8, 128) rule
    rows_padded = _round_up(rows, block_rows)
    padded_total = rows_padded * lane_width

    x_flat = x.reshape(-1)
    if padded_total != B:
        x_flat = jnp.pad(x_flat, (0, padded_total - B))
    x_2d = x_flat.reshape(rows_padded, lane_width)

    grid = (rows_padded // block_rows,)
    # 512 x 512 f32 tile = 1 MiB; double-buffered input + output ~= 4 MiB:
    # fits v7x's 32 MiB scoped-VMEM default and leaves DMA fully pipelined.
    tile_spec = pl.BlockSpec((block_rows, lane_width), lambda i: (i, 0))

    # Reuse the lane-dense input buffer as the output when dtypes match.
    io_aliases = {0: 0} if x_2d.dtype == jnp.float32 else {}

    out_2d = pl.pallas_call(
        _linear11_kernel,
        out_shape=jax.ShapeDtypeStruct((rows_padded, lane_width), jnp.float32),
        grid=grid,
        in_specs=[
            tile_spec,                                          # x tile (VMEM)
            pl.BlockSpec(memory_space=pltpu.MemorySpace.SMEM),  # weight scalar
            pl.BlockSpec(memory_space=pltpu.MemorySpace.SMEM),  # bias scalar
        ],
        out_specs=tile_spec,
        input_output_aliases=io_aliases,
        compiler_params=pltpu.CompilerParams(
            dimension_semantics=("parallel",),   # shard rows over v7x's 2 TCs
        ),
    )(x_2d, w_s, b_s)

    return out_2d.reshape(-1)[:B].reshape(B, 1)


class NetPallas:
    """JAX/Pallas port of the PyTorch `Net` module (a single Linear(1, 1))."""

    def __init__(self, key):
        in_features, out_features = 1, 1
        k_w, k_b = jax.random.split(key)
        # Deterministic init matching PyTorch Linear's U(-1/sqrt(in), 1/sqrt(in)).
        bound = 1.0 / (in_features ** 0.5)
        self.weight = jax.random.uniform(
            k_w, (out_features, in_features), jnp.float32, -bound, bound
        )
        self.bias = jax.random.uniform(
            k_b, (out_features,), jnp.float32, -bound, bound
        )

    def __call__(self, x):
        return linear_pallas(x, self.weight, self.bias)


if __name__ == "__main__":
    key = jax.random.PRNGKey(0)
    net = NetPallas(key)

    # Spec input: torch.tensor([[1.0]]) -> (1, 1). Tiny-batch fast path.
    x = jnp.array([[1.0]], dtype=jnp.float32)
    y = jax.block_until_ready(net(x))
    y_ref = x @ net.weight.T + net.bias
    assert y.shape == (1, 1)
    assert jnp.allclose(y, y_ref, atol=1e-6), (y, y_ref)

    # Batched input large enough to exercise the tiled lane-dense Pallas path.
    xb = jax.random.normal(jax.random.PRNGKey(1), (8192, 1), jnp.float32)
    yb = jax.block_until_ready(net(xb))
    yb_ref = xb @ net.weight.T + net.bias
    assert yb.shape == (8192, 1)
    assert jnp.allclose(yb, yb_ref, atol=1e-5), (yb, yb_ref)

    print("KERNEL_OK")
</pallas_src>

<mosaic_0001>
module attributes {stable_mosaic.version = 11 : i64} {
  func.func @_linear11_kernel(%arg0: i32, %arg1: memref<16x512xf32, #tpu.memory_space<vmem>>, %arg2: memref<1x1xf32, #tpu.memory_space<smem>>, %arg3: memref<1x1xf32, #tpu.memory_space<smem>>, %arg4: memref<16x512xf32, #tpu.memory_space<vmem>>) attributes {dimension_semantics = [#tpu.dimension_semantics<parallel>], iteration_bounds = array<i64: 1>, scalar_prefetch = 0 : i64, scratch_operands = 0 : i64, tpu.core_type = #tpu.core_type<tc>, window_params = [{transform_indices = @transform_0, window_bounds = array<i64: 16, 512>}, {transform_indices = @transform_1, window_bounds = array<i64: 1, 1>}, {transform_indices = @transform_2, window_bounds = array<i64: 1, 1>}, {transform_indices = @transform_3, window_bounds = array<i64: 16, 512>}]} {
    %c0 = arith.constant 0 : index
    %c0_0 = arith.constant 0 : index
    %0 = memref.load %arg2[%c0, %c0_0] : memref<1x1xf32, #tpu.memory_space<smem>>
    %c0_1 = arith.constant 0 : index
    %c0_2 = arith.constant 0 : index
    %1 = memref.load %arg3[%c0_1, %c0_2] : memref<1x1xf32, #tpu.memory_space<smem>>
    %c0_3 = arith.constant 0 : index
    %c0_4 = arith.constant 0 : index
    %2 = vector.load %arg1[%c0_3, %c0_4] : memref<16x512xf32, #tpu.memory_space<vmem>>, vector<16x512xf32>
    %3 = vector.broadcast %0 : f32 to vector<16x512xf32>
    %4 = arith.mulf %2, %3 : vector<16x512xf32>
    %5 = vector.broadcast %1 : f32 to vector<16x512xf32>
    %6 = arith.addf %4, %5 : vector<16x512xf32>
    %c0_5 = arith.constant 0 : index
    %c0_6 = arith.constant 0 : index
    %7 = vector.load %arg4[%c0_5, %c0_6] : memref<16x512xf32, #tpu.memory_space<vmem>>, vector<16x512xf32>
    tpu.vector_store %arg4[%c0_5, %c0_6], %6 {strides = array<i32>} : memref<16x512xf32, #tpu.memory_space<vmem>>, vector<16x512xf32>,
    return
  }
  func.func @transform_0(%arg0: i32) -> (i32, i32) {
    %c0_i32 = arith.constant 0 : i32
    %c0_i32_0 = arith.constant 0 : i32
    return %arg0, %c0_i32 : i32, i32
  }
  func.func @transform_1(%arg0: i32) -> (i32, i32) {
    %c0_i32 = arith.constant 0 : i32
    %c0_i32_0 = arith.constant 0 : i32
    %c0_i32_1 = arith.constant 0 : i32
    return %c0_i32, %c0_i32_0 : i32, i32
  }
  func.func @transform_2(%arg0: i32) -> (i32, i32) {
    %c0_i32 = arith.constant 0 : i32
    %c0_i32_0 = arith.constant 0 : i32
    %c0_i32_1 = arith.constant 0 : i32
    return %c0_i32, %c0_i32_0 : i32, i32
  }
  func.func @transform_3(%arg0: i32) -> (i32, i32) {
    %c0_i32 = arith.constant 0 : i32
    %c0_i32_0 = arith.constant 0 : i32
    return %arg0, %c0_i32 : i32, i32
  }
}

</mosaic_0001>

<llo_original>
// kernel: tpu_custom_call.1
$region0: #{tpu_custom_call.1}
  #allocation0 [shape = 'u32[]', space=smem, size = 0x4, offset = 0x4, fixed_abs, tag = 'smem constant byte address 0x4 - core index']
  #allocation1 [shape = 'u32[144,128]{1,0:T(1,128)}', space=vmem, size = 0x12000, scoped, tag = 'internal scratch']
  #allocation2 [shape = 'f32[1,1]{1,0:T(1,128)S(6)}', space=smem, size = 0x200, scoped, tag = 'scoped memory for tpu_custom_call.1']
  #allocation3 [shape = 'f32[1,1]{1,0:T(1,128)S(6)}', space=smem, size = 0x200, scoped, tag = 'scoped memory for tpu_custom_call.1']
  %s0 = inlined_call_operand.hbm [shape: f32[16,512], index: 0, kind: input, shape index: {}, may-alias: {0,3}]
  %s1 = inlined_call_operand.<no memory space> [shape: f32[1,1], index: 1, kind: input, shape index: {}]
  %s2 = inlined_call_operand.<no memory space> [shape: f32[1,1], index: 2, kind: input, shape index: {}]
  %s3 = inlined_call_operand.hbm [shape: f32[16,512], index: 3, kind: output, shape index: {}, may-alias: {0,3}]
  %s4 = sld [smem:[#allocation0]]
  $region26: #{tpu_custom_call.1} parent=0
    _
  %s6 = ssub.s32 1, %s4
  %s7 = scalar_select 0, %s6, %s4
  %8 = sst [smem:[#allocation2]] %s1
  %9 = sst [smem:[#allocation3]] %s2
  $region1: #{tpu_custom_call.1} parent=0
    #allocation4 [shape = 'u8[32768]{0}', space=vmem, size = 0x8000, scoped, tag = 'input window, operand 0, single buffered']
    #allocation5 [shape = 's32[1]{0}', space=sflag, size = 0x4, scoped, tag = 'scoped memory for tpu_custom_call.1']
    #allocation6 [shape = 's32[1]{0}', space=sflag, size = 0x4, scoped, tag = 'scoped memory for tpu_custom_call.1']
    #allocation7 [shape = 'u8[32768]{0}', space=vmem, size = 0x8000, scoped, tag = 'output window, operand 0, single buffered']
    %10 = vsyncpa [#allocation5], 0
    %11 = vsyncpa [#allocation6], 0
    // Predicated region
    $region2: #{tpu_custom_call.1} parent=1 // pred_check
      _
    $region3: #{tpu_custom_call.1} parent=1 // pred_check_branch
      %13 = sbr.rel (0) target = $region5
    $region4: #{tpu_custom_call.1} parent=1 // pred_region
      %s15 = ssub.s32 1024, 1024
      %16 = vsyncadd [#allocation5], %s15
      %s17 = sshll.u32 [#allocation4], 4
      %s18 = int_to_ptr.vmem [resolvable:$true] %s17
      %23 = dma.hbm_to_vmem [thread:$0]  %s0, 1024, %s18, [#allocation5], 512, 512, 32
    $region5: #{tpu_custom_call.1} parent=1 // pred_fallthru
      _
    // Predicated region
    $region6: #{tpu_custom_call.1} parent=1 // pred_check
      _
    $region7: #{tpu_custom_call.1} parent=1 // pred_check_branch
      %25 = sbr.rel (0) target = $region9
    $region8: #{tpu_custom_call.1} parent=1 // pred_region
      _
    $region9: #{tpu_custom_call.1} parent=1 // pred_fallthru
      _
    // Predicated region
    $region10: #{tpu_custom_call.1} parent=1 // pred_check
      _
    $region11: #{tpu_custom_call.1} parent=1 // pred_check_branch
      %27 = sbr.rel (0) target = $region13
    $region12: #{tpu_custom_call.1} parent=1 // pred_region
      _
    $region13: #{tpu_custom_call.1} parent=1 // pred_fallthru
      _
    // Predicated region
    $region14: #{tpu_custom_call.1} parent=1 // pred_check
      _
    $region15: #{tpu_custom_call.1} parent=1 // pred_check_branch
      %29 = sbr.rel (0) target = $region17
    $region16: #{tpu_custom_call.1} parent=1 // pred_region
      %30 = dma.done [#allocation5], 1024
    $region17: #{tpu_custom_call.1} parent=1 // pred_fallthru
      _
    %s31 = sld [smem:[#allocation2]]
    %s32 = sld [smem:[#allocation3]]
    %v33 = vld [vmem:[#allocation4] sm:$0xff]
    %v34 = vld [vmem:[#allocation4 + $0x8] sm:$0xff]
    %v35 = vld [vmem:[#allocation4 + $0x10] sm:$0xff]
    %v36 = vld [vmem:[#allocation4 + $0x18] sm:$0xff]
    %v37 = vld [vmem:[#allocation4 + $0x20] sm:$0xff]
    %v38 = vld [vmem:[#allocation4 + $0x28] sm:$0xff]
    %v39 = vld [vmem:[#allocation4 + $0x30] sm:$0xff]
    %v40 = vld [vmem:[#allocation4 + $0x38] sm:$0xff]
    %v41 = vstv %s31
    %v42 = vmul.f32 %v33, %v41
    %v43 = vmul.f32 %v34, %v41
    %v44 = vmul.f32 %v35, %v41
    %v45 = vmul.f32 %v36, %v41
    %v46 = vmul.f32 %v37, %v41
    %v47 = vmul.f32 %v38, %v41
    %v48 = vmul.f32 %v39, %v41
    %v49 = vmul.f32 %v40, %v41
    %v50 = vstv %s32
    %v51 = vadd.f32 %v42, %v50
    %v52 = vadd.f32 %v43, %v50
    %v53 = vadd.f32 %v44, %v50
    %v54 = vadd.f32 %v45, %v50
    %v55 = vadd.f32 %v46, %v50
    %v56 = vadd.f32 %v47, %v50
    %v57 = vadd.f32 %v48, %v50
    %v58 = vadd.f32 %v49, %v50
    %59 = vst [vmem:[#allocation7] sm:$0xff] %v51
    %60 = vst [vmem:[#allocation7 + $0x8] sm:$0xff] %v52
    %61 = vst [vmem:[#allocation7 + $0x10] sm:$0xff] %v53
    %62 = vst [vmem:[#allocation7 + $0x18] sm:$0xff] %v54
    %63 = vst [vmem:[#allocation7 + $0x20] sm:$0xff] %v55
    %64 = vst [vmem:[#allocation7 + $0x28] sm:$0xff] %v56
    %65 = vst [vmem:[#allocation7 + $0x30] sm:$0xff] %v57
    %66 = vst [vmem:[#allocation7 + $0x38] sm:$0xff] %v58
    // Predicated region
    $region18: #{tpu_custom_call.1} parent=1 // pred_check
      _
    $region19: #{tpu_custom_call.1} parent=1 // pred_check_branch
      %68 = sbr.rel (0) target = $region21
    $region20: #{tpu_custom_call.1} parent=1 // pred_region
      %s70 = ssub.s32 1024, 1024
      %71 = vsyncadd [#allocation6], %s70
      %s72 = sshll.u32 [#allocation7], 4
      %s73 = int_to_ptr.vmem [resolvable:$true] %s72
      %78 = dma.vmem_to_hbm [thread:$0]  %s73, 1024, %s3, [#allocation6], 512, 512, 32
    $region21: #{tpu_custom_call.1} parent=1 // pred_fallthru
      _
    // Predicated region
    $region22: #{tpu_custom_call.1} parent=1 // pred_check
      _
    $region23: #{tpu_custom_call.1} parent=1 // pred_check_branch
      %80 = sbr.rel (0) target = $region25
    $region24: #{tpu_custom_call.1} parent=1 // pred_region
      %81 = dma.done [#allocation6], 1024
    $region25: #{tpu_custom_call.1} parent=1 // pred_fallthru
      _
    %82 = vsyncpa [#allocation5], 1
    %83 = vsyncpa [#allocation6], 1

</llo_original>
